<compile_context>
chip_gen: v5e
topology: v5e:2x2
jax: 0.10.0
libtpu: 0.0.40
codegen_flags: <defaults>
</compile_context>

<pallas_src>
import functools

import jax
import jax.numpy as jnp
from jax.experimental import pallas as pl
from jax.experimental.pallas import tpu as pltpu


def att_p_kernel(v_ref, qz_ref, w12_ref, w3_ref, out_ref, *,
                 num_objs, num_hid, gate_dtype):
    # v_ref: (TB, Kp, vdim) matmul_dtype   qz_ref: (TB, 2H) f32 (q-side + biases, sig half pre-scaled 0.5)
    # w12:   (vdim, 2H) matmul_dtype       w3:     (1, H)  f32
    # out:   (TB, Kp) f32
    TB, Kp, vdim = v_ref.shape
    H2 = w12_ref.shape[-1]
    H = num_hid

    # Flatten batch into M (Kp is a multiple of 8, so this reshape is layout-preserving).
    v = v_ref[...].reshape(TB * Kp, vdim)

    # One fused MXU matmul for both gate branches (bf16 in, f32 accumulate),
    # then broadcast-add the hoisted q-side contribution (already includes biases).
    z = jnp.dot(v, w12_ref[...], preferred_element_type=jnp.float32)     # [TB*Kp, 2H]
    z = z.reshape(TB, Kp, H2) + qz_ref[...][:, None, :]                  # [TB, Kp, 2H]

    # Gated tanh unit via the identity sigmoid(x) = 0.5*tanh(x/2) + 0.5
    # (the x/2 pre-scaling was done on the weights/qz in the wrapper), so one
    # tanh pass over the fused 2H block feeds both branches.
    t = jnp.tanh(z.astype(gate_dtype))
    h = t[..., :H] * (t[..., H:] * 0.5 + 0.5)                            # [TB, Kp, H]

    # Final H -> 1 projection as a VPU multiply + lane reduce (no N=1 MXU matmul).
    logits = jnp.sum((h * w3_ref[...][None, :, :].astype(gate_dtype)).astype(jnp.float32),
                     axis=-1)                                            # [TB, Kp]

    # Mask padded objects so they get exactly zero probability.
    # (num_objs >= 1 is asserted in the wrapper, so a row can never be all -inf.)
    if Kp != num_objs:
        lane = jax.lax.broadcasted_iota(jnp.int32, (TB, Kp), 1)
        logits = jnp.where(lane < num_objs, logits, -jnp.inf)

    # Softmax over the object (lane) axis; exact divide so rows sum to 1.
    m = jnp.max(logits, axis=-1, keepdims=True)
    e = jnp.exp(logits - m)
    s = jnp.sum(e, axis=-1, keepdims=True)
    out_ref[...] = (e / s).astype(out_ref.dtype)


def weight_norm_dim_none(v, g):
    """PyTorch weight_norm(dim=None): w = g * v / ||v||_F (scalar g)."""
    return g * v / jnp.sqrt(jnp.sum(v * v))


def _round_up(x, m):
    return -(-x // m) * m


def att_p_forward(v, q, params, *, matmul_dtype=jnp.bfloat16, gate_dtype=jnp.float32):
    # gate_dtype=jnp.bfloat16 is a valid speed knob on v6e/v7x (bf16 VPU/EUP);
    # keep f32 on v5e and whenever exact probabilities matter.
    B, K, vdim = v.shape
    _, qdim = q.shape
    H = params["b1"].shape[-1]
    assert K >= 1, "softmax over zero objects would be NaN"

    # Effective weights after the weight_norm parametrization (glue, plain JAX).
    w1 = weight_norm_dim_none(params["w1_v"], params["w1_g"])   # [H, vdim+qdim]
    w2 = weight_norm_dim_none(params["w2_v"], params["w2_g"])
    w3 = weight_norm_dim_none(params["w3_v"], params["w3_g"])   # [1, H]

    # Fused v-side gate weight [vdim, 2H]; sigmoid half pre-scaled by 0.5 for the
    # tanh identity (0.5 is a power of two, exact even after the bf16 cast).
    w1v = jnp.transpose(w1[:, :vdim])                            # [vdim, H]
    w2v = 0.5 * jnp.transpose(w2[:, :vdim])
    w12 = jnp.concatenate([w1v, w2v], axis=1).astype(matmul_dtype)   # [vdim, 2H]
    w3r = w3.astype(jnp.float32)                                      # [1, H]

    # Hoisted q-side projections (one full-batch matmul each) + biases, f32.
    qz1 = q @ jnp.transpose(w1[:, vdim:]) + params["b1"]          # [B, H]
    qz2 = 0.5 * (q @ jnp.transpose(w2[:, vdim:]) + params["b2"])  # pre-scaled for tanh identity
    qz12 = jnp.concatenate([qz1, qz2], axis=1).astype(jnp.float32)    # [B, 2H]
    # b3 dropped: a constant added to every logit cancels in the softmax.

    Kp = _round_up(K, 8)
    H2 = 2 * H
    wbytes = jnp.dtype(matmul_dtype).itemsize

    # Generation-aware VMEM budget: ~96 MiB on v5e/v6e (128 MiB physical),
    # ~48 MiB on v7x (64 MiB physical).  Fall back to the v7x-safe figure.
    try:
        vmem_cap = int(pltpu.get_tpu_info().vmem_capacity_bytes)
    except Exception:
        vmem_cap = 64 << 20
    vmem_budget = min(max((vmem_cap * 3) // 4, 32 << 20), 100 << 20)

    # Size TB from the VMEM budget: double-buffered v/qz/out blocks plus f32 gate
    # temps, weights counted twice (worst case), 4 MiB headroom.  Target TB*Kp in
    # the ~2048-4096 row range (256 is only the MXU-M floor).
    weight_bytes = 2 * (vdim * H2 * wbytes + H * 4)
    row_bytes = (2 * Kp * vdim * wbytes     # v block (double-buffered)
                 + 2 * H2 * 4               # fused qz block (double-buffered)
                 + 2 * Kp * 4               # out block (double-buffered)
                 + 4 * Kp * H2 * 4)         # f32 gate temps (z, t, h, products)
    tb_vmem = max(1, (vmem_budget - weight_bytes - (4 << 20)) // row_bytes)
    tb_target = max(1, min(tb_vmem, max(-(-256 // Kp), 4096 // max(Kp, 1))))

    # v7x has 2 TensorCores and "parallel" grid axes shard across them: never emit
    # a 1-step grid there (64 MiB VMEM is the v7x proxy).  v5e/v6e: 1 TC, no split.
    min_steps = 2 if vmem_cap <= (64 << 20) else 1
    if tb_target * min_steps >= B:
        TB = max(8, _round_up(-(-B // min_steps), 8))
        Bp = max(_round_up(B, TB), min_steps * TB)
    else:
        TB = _round_up(tb_target, 8)
        Bp = _round_up(B, TB)
    steps = Bp // TB

    v_p = jnp.pad(v.astype(matmul_dtype), ((0, Bp - B), (0, Kp - K), (0, 0)))
    qz_p = jnp.pad(qz12, ((0, Bp - B), (0, 0)))

    # Advisory cost estimate for XLA's scheduler.
    flops = 2 * Bp * Kp * vdim * H2 + Bp * Kp * (5 * H + 8)
    transcendentals = Bp * Kp * (H2 + 1)
    bytes_accessed = (v_p.size * wbytes + Bp * H2 * 4
                      + vdim * H2 * wbytes + H * 4 + Bp * Kp * 4)

    def _const_spec(shape):
        # Constant-index weight blocks: single-buffer them (their index_map never
        # changes, so a second buffer is pure VMEM waste).
        idx_map = lambda b: (0,) * len(shape)
        try:
            return pl.BlockSpec(shape, idx_map, pipeline_mode=pl.Buffered(1))
        except TypeError:  # older jax without pipeline_mode on BlockSpec
            return pl.BlockSpec(shape, idx_map)

    out = pl.pallas_call(
        functools.partial(att_p_kernel, num_objs=K, num_hid=H, gate_dtype=gate_dtype),
        out_shape=jax.ShapeDtypeStruct((Bp, Kp), jnp.float32),
        grid=(steps,),
        in_specs=[
            pl.BlockSpec((TB, Kp, vdim), lambda b: (b, 0, 0)),
            pl.BlockSpec((TB, H2), lambda b: (b, 0)),
            _const_spec((vdim, H2)),
            _const_spec((1, H)),
        ],
        out_specs=pl.BlockSpec((TB, Kp), lambda b: (b, 0)),
        compiler_params=pltpu.CompilerParams(
            dimension_semantics=("parallel",),
            vmem_limit_bytes=int(vmem_budget)),
        cost_estimate=pl.CostEstimate(
            flops=int(flops), transcendentals=int(transcendentals),
            bytes_accessed=int(bytes_accessed)),
    )(v_p, qz_p, w12, w3r)

    return out[:B, :K].reshape(B, K, 1).astype(v.dtype)


def att_p_reference(v, q, params):
    """Pure-JAX reference mirroring the PyTorch forward (all f32)."""
    B, K, vdim = v.shape
    w1 = weight_norm_dim_none(params["w1_v"], params["w1_g"])
    w2 = weight_norm_dim_none(params["w2_v"], params["w2_g"])
    w3 = weight_norm_dim_none(params["w3_v"], params["w3_g"])
    qr = jnp.broadcast_to(q[:, None, :], (B, K, q.shape[-1]))
    vq = jnp.concatenate([v, qr], axis=2)                              # [B,K,D]
    z1 = jnp.einsum("bkd,hd->bkh", vq, w1) + params["b1"]
    z2 = jnp.einsum("bkd,hd->bkh", vq, w2) + params["b2"]
    h = jnp.tanh(z1) * jax.nn.sigmoid(z2)
    logits = jnp.einsum("bkh,oh->bko", h, w3) + params["b3"]           # [B,K,1]
    return jax.nn.softmax(logits, axis=1)


def init_params(key, vdim, qdim, num_hid):
    D = vdim + qdim
    k1, k2, k3, k4, k5, k6 = jax.random.split(key, 6)
    w1_v = 0.1 * jax.random.normal(k1, (num_hid, D), jnp.float32)
    w2_v = 0.1 * jax.random.normal(k2, (num_hid, D), jnp.float32)
    w3_v = 0.1 * jax.random.normal(k3, (1, num_hid), jnp.float32)
    # weight_norm init: g = ||v||_F so the effective weight equals the raw init.
    params = {
        "w1_v": w1_v, "w1_g": jnp.sqrt(jnp.sum(w1_v ** 2)),
        "b1": 0.1 * jax.random.normal(k4, (num_hid,), jnp.float32),
        "w2_v": w2_v, "w2_g": jnp.sqrt(jnp.sum(w2_v ** 2)),
        "b2": 0.1 * jax.random.normal(k5, (num_hid,), jnp.float32),
        "w3_v": w3_v, "w3_g": jnp.sqrt(jnp.sum(w3_v ** 2)),
        "b3": 0.1 * jax.random.normal(k6, (1,), jnp.float32),
    }
    return params
    # TODO(synk): dropout=0.0 in the reference module; training-mode dropout not implemented.


if __name__ == "__main__":
    B, K, vdim, qdim, num_hid = 2, 36, 16, 16, 32     # K=36 exercises the pad+mask path
    key = jax.random.PRNGKey(0)
    kv, kq, kp = jax.random.split(key, 3)
    v = jax.random.normal(kv, (B, K, vdim), jnp.float32)
    q = jax.random.normal(kq, (B, qdim), jnp.float32)
    params = init_params(kp, vdim, qdim, num_hid)

    out = jax.block_until_ready(att_p_forward(v, q, params))                    # bf16 MXU path
    out_f32 = jax.block_until_ready(
        att_p_forward(v, q, params, matmul_dtype=jnp.float32))                  # f32 sanity path
    ref = jax.block_until_ready(att_p_reference(v, q, params))

    assert out.shape == (B, K, 1)
    assert jnp.allclose(out_f32, ref, atol=5e-4, rtol=1e-3), "f32 kernel mismatch vs reference"
    assert jnp.allclose(out, ref, atol=5e-3, rtol=5e-2), "bf16 kernel mismatch vs reference"
    # Exact softmax normalization (divide, not approx reciprocal) -> rows sum to 1.
    assert jnp.allclose(jnp.sum(out, axis=1), 1.0, atol=1e-3)
    assert jnp.allclose(jnp.sum(out_f32, axis=1), 1.0, atol=1e-3)
    print("KERNEL_OK")
</pallas_src>

<mosaic_0001>
module attributes {stable_mosaic.version = 11 : i64} {
  func.func @att_p_kernel(%arg0: i32, %arg1: memref<8x40x16xbf16, #tpu.memory_space<vmem>>, %arg2: memref<8x64xf32, #tpu.memory_space<vmem>>, %arg3: memref<16x64xbf16, #tpu.memory_space<vmem>>, %arg4: memref<1x32xf32, #tpu.memory_space<vmem>>, %arg5: memref<8x40xf32, #tpu.memory_space<vmem>>) attributes {dimension_semantics = [#tpu.dimension_semantics<parallel>], iteration_bounds = array<i64: 2>, scalar_prefetch = 0 : i64, scratch_operands = 0 : i64, tpu.core_type = #tpu.core_type<tc>, window_params = [{transform_indices = @transform_0, window_bounds = array<i64: 8, 40, 16>}, {transform_indices = @transform_1, window_bounds = array<i64: 8, 64>}, {pipeline_mode = #tpu.pipeline_mode<synchronous>, transform_indices = @transform_2, window_bounds = array<i64: 16, 64>}, {pipeline_mode = #tpu.pipeline_mode<synchronous>, transform_indices = @transform_3, window_bounds = array<i64: 1, 32>}, {transform_indices = @transform_4, window_bounds = array<i64: 8, 40>}]} {
    %c0 = arith.constant 0 : index
    %c0_0 = arith.constant 0 : index
    %c0_1 = arith.constant 0 : index
    %0 = vector.load %arg1[%c0, %c0_0, %c0_1] : memref<8x40x16xbf16, #tpu.memory_space<vmem>>, vector<8x40x16xbf16>
    %1 = vector.shape_cast %0 : vector<8x40x16xbf16> to vector<320x16xbf16>
    %c0_2 = arith.constant 0 : index
    %c0_3 = arith.constant 0 : index
    %2 = vector.load %arg3[%c0_2, %c0_3] : memref<16x64xbf16, #tpu.memory_space<vmem>>, vector<16x64xbf16>
    %cst = arith.constant dense<0.000000e+00> : vector<320x64xf32>
    %3 = tpu.matmul %1, %2, %cst {dimension_numbers = #tpu.dot_dimension_numbers<[1], [0], [0], [1], [0, 0, 1, 1], [], []>} : vector<320x16xbf16>, vector<16x64xbf16>, vector<320x64xf32> -> vector<320x64xf32>
    %4 = vector.shape_cast %3 : vector<320x64xf32> to vector<8x40x64xf32>
    %c0_4 = arith.constant 0 : index
    %c0_5 = arith.constant 0 : index
    %5 = vector.load %arg2[%c0_4, %c0_5] : memref<8x64xf32, #tpu.memory_space<vmem>>, vector<8x64xf32>
    %6 = vector.shape_cast %5 : vector<8x64xf32> to vector<8x1x64xf32>
    %7 = vector.broadcast %6 : vector<8x1x64xf32> to vector<8x40x64xf32>
    %8 = arith.addf %4, %7 : vector<8x40x64xf32>
    %9 = math.tanh %8 : vector<8x40x64xf32>
    %10 = vector.extract_strided_slice %9 {offsets = [0, 0, 0], sizes = [8, 40, 32], strides = [1, 1, 1]} : vector<8x40x64xf32> to vector<8x40x32xf32>
    %11 = vector.extract_strided_slice %9 {offsets = [0, 0, 32], sizes = [8, 40, 32], strides = [1, 1, 1]} : vector<8x40x64xf32> to vector<8x40x32xf32>
    %cst_6 = arith.constant 5.000000e-01 : f32
    %12 = vector.broadcast %cst_6 : f32 to vector<8x40x32xf32>
    %13 = arith.mulf %11, %12 : vector<8x40x32xf32>
    %cst_7 = arith.constant 5.000000e-01 : f32
    %14 = vector.broadcast %cst_7 : f32 to vector<8x40x32xf32>
    %15 = arith.addf %13, %14 : vector<8x40x32xf32>
    %16 = arith.mulf %10, %15 : vector<8x40x32xf32>
    %c0_8 = arith.constant 0 : index
    %c0_9 = arith.constant 0 : index
    %17 = vector.load %arg4[%c0_8, %c0_9] : memref<1x32xf32, #tpu.memory_space<vmem>>, vector<1x32xf32>
    %18 = vector.shape_cast %17 : vector<1x32xf32> to vector<1x1x32xf32>
    %19 = vector.broadcast %18 : vector<1x1x32xf32> to vector<8x40x32xf32>
    %20 = arith.mulf %16, %19 : vector<8x40x32xf32>
    %cst_10 = arith.constant dense<0.000000e+00> : vector<8x40xf32>
    %21 = vector.multi_reduction <add>, %20, %cst_10 [2] : vector<8x40x32xf32> to vector<8x40xf32>
    %22 = tpu.iota {dimensions = array<i32: 1>} : vector<8x40xi32>
    %c36_i32 = arith.constant 36 : i32
    %23 = vector.broadcast %c36_i32 : i32 to vector<8x40xi32>
    %24 = arith.cmpi slt, %22, %23 : vector<8x40xi32>
    %cst_11 = arith.constant 0xFF800000 : f32
    %25 = vector.broadcast %cst_11 : f32 to vector<8x40xf32>
    %26 = arith.select %24, %21, %25 : vector<8x40xi1>, vector<8x40xf32>
    %cst_12 = arith.constant dense<0xFF800000> : vector<8xf32>
    %27 = vector.multi_reduction <maximumf>, %26, %cst_12 [1] : vector<8x40xf32> to vector<8xf32>
    %28 = vector.shape_cast %27 : vector<8xf32> to vector<8x1xf32>
    %29 = vector.broadcast %28 : vector<8x1xf32> to vector<8x40xf32>
    %30 = arith.subf %26, %29 : vector<8x40xf32>
    %31 = math.exp %30 : vector<8x40xf32>
    %cst_13 = arith.constant dense<0.000000e+00> : vector<8xf32>
    %32 = vector.multi_reduction <add>, %31, %cst_13 [1] : vector<8x40xf32> to vector<8xf32>
    %33 = vector.shape_cast %32 : vector<8xf32> to vector<8x1xf32>
    %34 = vector.broadcast %33 : vector<8x1xf32> to vector<8x40xf32>
    %35 = arith.divf %31, %34 : vector<8x40xf32>
    %c0_14 = arith.constant 0 : index
    %c0_15 = arith.constant 0 : index
    %36 = vector.load %arg5[%c0_14, %c0_15] : memref<8x40xf32, #tpu.memory_space<vmem>>, vector<8x40xf32>
    tpu.vector_store %arg5[%c0_14, %c0_15], %35 {strides = array<i32>} : memref<8x40xf32, #tpu.memory_space<vmem>>, vector<8x40xf32>,
    return
  }
  func.func @transform_0(%arg0: i32) -> (i32, i32, i32) {
    %c0_i32 = arith.constant 0 : i32
    %c0_i32_0 = arith.constant 0 : i32
    %c0_i32_1 = arith.constant 0 : i32
    return %arg0, %c0_i32, %c0_i32_0 : i32, i32, i32
  }
  func.func @transform_1(%arg0: i32) -> (i32, i32) {
    %c0_i32 = arith.constant 0 : i32
    %c0_i32_0 = arith.constant 0 : i32
    return %arg0, %c0_i32 : i32, i32
  }
  func.func @transform_2(%arg0: i32) -> (i32, i32) {
    %c0_i32 = arith.constant 0 : i32
    %c0_i32_0 = arith.constant 0 : i32
    %c0_i32_1 = arith.constant 0 : i32
    return %c0_i32, %c0_i32_0 : i32, i32
  }
  func.func @transform_3(%arg0: i32) -> (i32, i32) {
    %c0_i32 = arith.constant 0 : i32
    %c0_i32_0 = arith.constant 0 : i32
    %c0_i32_1 = arith.constant 0 : i32
    return %c0_i32, %c0_i32_0 : i32, i32
  }
  func.func @transform_4(%arg0: i32) -> (i32, i32) {
    %c0_i32 = arith.constant 0 : i32
    %c0_i32_0 = arith.constant 0 : i32
    return %arg0, %c0_i32 : i32, i32
  }
}

</mosaic_0001>

<llo_original>
// kernel: tpu_custom_call.1
$region0: #{tpu_custom_call.1}
  #allocation0 [shape = 'u32[]', space=smem, size = 0x4, offset = 0x4, fixed_abs, tag = 'smem constant byte address 0x4 - core index']
  #allocation1 [shape = 'u32[72,128]{1,0:T(1,128)}', space=vmem, size = 0x9000, scoped, tag = 'internal scratch']
  %s0 = inlined_call_operand.vmem [shape: bf16[16,40,16], index: 0, kind: input, shape index: {}]
  %s1 = inlined_call_operand.vmem [shape: f32[16,64], index: 1, kind: input, shape index: {}]
  %s2 = inlined_call_operand.vmem [shape: bf16[16,64], index: 2, kind: input, shape index: {}]
  %s3 = inlined_call_operand.vmem [shape: f32[1,32], index: 3, kind: input, shape index: {}]
  %s4 = inlined_call_operand.hbm [shape: f32[16,40], index: 4, kind: output, shape index: {}]
  %s5 = sld [smem:[#allocation0]]
  $region49: #{tpu_custom_call.1} parent=0
    _
  %s7 = ssub.s32 1, %s5
  %s8 = scalar_select 0, %s7, %s5
  $region1: #{tpu_custom_call.1} parent=0
    #allocation2 [shape = 'u8[8192]{0}', space=vmem, size = 0x2000, scoped, tag = 'output window, operand 0']
    #allocation3 [shape = 's32[2]{0}', space=sflag, size = 0x8, scoped, tag = 'scoped memory for tpu_custom_call.1']
    %9 = vsyncpa [#allocation3], 0
    %s10 = scalar_lea.sflag [#allocation3], 1
    %11 = vsyncpa %s10, 0
    loop: start=0, step=1, limit=4
    $region2: #{tpu_custom_call.1} parent=1 // loop_pre_header
      _
    $region3: #{tpu_custom_call.1} parent=1 // loop_header
      %s13 = sphi 0, %s17
      %p14 = scmp.ge.s32.totalorder %s13, 4
      %s23 = sphi 0, %s25
      %s26 = sphi 0, %s23
      %s27 = sphi 0, %s26
      %s43 = sphi 0, %s27
      %s49 = sphi 0, %s51
      %s52 = sphi 0, %s49
      %s53 = sphi 0, %s52
      %s69 = sphi 0, %s53
      %s73 = sphi 0, %s73
      %s75 = sphi 0, %s73
      %s76 = sphi 0, %s75
      %s90 = sphi 0, %s76
      %s94 = sphi 0, %s94
      %s96 = sphi 0, %s94
      %s97 = sphi 0, %s96
      %s111 = sphi 0, %s97
      %s117 = sphi 0, %s119
      %s120 = sphi 0, %s117
      %s121 = sphi 0, %s120
      %s137 = sphi 0, %s121
    $region4: #{tpu_custom_call.1} parent=1 // loop_header_branch
      %16 = sbr.rel (%p14) target = $region8
    $region5: #{tpu_custom_call.1} parent=1 // loop_body
      %s18 = ssub.s32 %s13, 1
      %s19 = ssub.s32 %s13, 2
      %s20 = sadd.s32 %s13, 1
      %s21 = ssub.s32 %s13, %s20
      %p22 = scmp.eq.s32.totalorder %s21, 0
      %s24 = sadd.s32 %s23, 1
      %s25 = scalar_select %p22, %s23, %s24
      %p28 = pneg %p22
      %p29 = scmp.eq.s32.totalorder %s13, 1
      %p30 = por %p28, %p29
      %p31 = scmp.ne.s32.totalorder %s23, %s26
      %p32 = scmp.eq.s32.totalorder %s13, 0
      %p33 = por %p31, %p32
      %p34 = scmp.ne.s32.totalorder %s23, %s26
      %p35 = scmp.eq.s32.totalorder %s18, 1
      %p36 = por %p34, %p35
      %p37 = scmp.ne.s32.totalorder %s26, %s27
      %p38 = scmp.eq.s32.totalorder %s18, 0
      %p39 = por %p37, %p38
      %p40 = scmp.ne.s32.totalorder %s26, %s27
      %p41 = scmp.eq.s32.totalorder %s19, 1
      %p42 = por %p40, %p41
      %p44 = scmp.ne.s32.totalorder %s27, %s43
      %p45 = scmp.eq.s32.totalorder %s19, 0
      %p46 = por %p44, %p45
      %s47 = ssub.s32 %s13, %s20
      %p48 = scmp.eq.s32.totalorder %s47, 0
      %s50 = sadd.s32 %s49, 1
      %s51 = scalar_select %p48, %s49, %s50
      %p54 = pneg %p48
      %p55 = scmp.eq.s32.totalorder %s13, 1
      %p56 = por %p54, %p55
      %p57 = scmp.ne.s32.totalorder %s49, %s52
      %p58 = scmp.eq.s32.totalorder %s13, 0
      %p59 = por %p57, %p58
      %p60 = scmp.ne.s32.totalorder %s49, %s52
      %p61 = scmp.eq.s32.totalorder %s18, 1
      %p62 = por %p60, %p61
      %p63 = scmp.ne.s32.totalorder %s52, %s53
      %p64 = scmp.eq.s32.totalorder %s18, 0
      %p65 = por %p63, %p64
      %p66 = scmp.ne.s32.totalorder %s52, %s53
      %p67 = scmp.eq.s32.totalorder %s19, 1
      %p68 = por %p66, %p67
      %p70 = scmp.ne.s32.totalorder %s53, %s69
      %p71 = scmp.eq.s32.totalorder %s19, 0
      %p72 = por %p70, %p71
      %s74 = sadd.s32 %s73, 1
      %p77 = scmp.eq.s32.totalorder %s13, 1
      %p78 = scmp.ne.s32.totalorder %s73, %s75
      %p79 = scmp.eq.s32.totalorder %s13, 0
      %p80 = por %p78, %p79
      %p81 = scmp.ne.s32.totalorder %s73, %s75
      %p82 = scmp.eq.s32.totalorder %s18, 1
      %p83 = por %p81, %p82
      %p84 = scmp.ne.s32.totalorder %s75, %s76
      %p85 = scmp.eq.s32.totalorder %s18, 0
      %p86 = por %p84, %p85
      %p87 = scmp.ne.s32.totalorder %s75, %s76
      %p88 = scmp.eq.s32.totalorder %s19, 1
      %p89 = por %p87, %p88
      %p91 = scmp.ne.s32.totalorder %s76, %s90
      %p92 = scmp.eq.s32.totalorder %s19, 0
      %p93 = por %p91, %p92
      %s95 = sadd.s32 %s94, 1
      %p98 = scmp.eq.s32.totalorder %s13, 1
      %p99 = scmp.ne.s32.totalorder %s94, %s96
      %p100 = scmp.eq.s32.totalorder %s13, 0
      %p101 = por %p99, %p100
      %p102 = scmp.ne.s32.totalorder %s94, %s96
      %p103 = scmp.eq.s32.totalorder %s18, 1
      %p104 = por %p102, %p103
      %p105 = scmp.ne.s32.totalorder %s96, %s97
      %p106 = scmp.eq.s32.totalorder %s18, 0
      %p107 = por %p105, %p106
      %p108 = scmp.ne.s32.totalorder %s96, %s97
      %p109 = scmp.eq.s32.totalorder %s19, 1
      %p110 = por %p108, %p109
      %p112 = scmp.ne.s32.totalorder %s97, %s111
      %p113 = scmp.eq.s32.totalorder %s19, 0
      %p114 = por %p112, %p113
      %s115 = ssub.s32 %s13, %s20
      %p116 = scmp.eq.s32.totalorder %s115, 0
      %s118 = sadd.s32 %s117, 1
      %s119 = scalar_select %p116, %s117, %s118
      %p122 = pneg %p116
      %p123 = scmp.eq.s32.totalorder %s13, 1
      %p124 = por %p122, %p123
      %p125 = scmp.ne.s32.totalorder %s117, %s120
      %p126 = scmp.eq.s32.totalorder %s13, 0
      %p127 = por %p125, %p126
      %p128 = scmp.ne.s32.totalorder %s117, %s120
      %p129 = scmp.eq.s32.totalorder %s18, 1
      %p130 = por %p128, %p129
      %p131 = scmp.ne.s32.totalorder %s120, %s121
      %p132 = scmp.eq.s32.totalorder %s18, 0
      %p133 = por %p131, %p132
      %p134 = scmp.ne.s32.totalorder %s120, %s121
      %p135 = scmp.eq.s32.totalorder %s19, 1
      %p136 = por %p134, %p135
      %p138 = scmp.ne.s32.totalorder %s121, %s137
      %p139 = scmp.eq.s32.totalorder %s19, 0
      %p140 = por %p138, %p139
      %p141 = scmp.le.s32.totalorder 1, %s13
      %p142 = scmp.lt.s32.totalorder %s13, 3
      %p143 = pnand %p141, %p142
      %p144 = pneg %p143
      // Predicated region
      $region9: #{tpu_custom_call.1} parent=5 // pred_check
        _
      $region10: #{tpu_custom_call.1} parent=5 // pred_check_branch
        %146 = sbr.rel (%p143) target = $region12
      $region11: #{tpu_custom_call.1} parent=5 // pred_region
        %s147 = ssub.s32 %s13, 1
        // Predicated region
        $region13: #{tpu_custom_call.1} parent=11 // pred_check
          %p148 = pneg %p86
        $region14: #{tpu_custom_call.1} parent=11 // pred_check_branch
          %150 = sbr.rel (%p148) target = $region16
        $region15: #{tpu_custom_call.1} parent=11 // pred_region
          _
        $region16: #{tpu_custom_call.1} parent=11 // pred_fallthru
          _
        // Predicated region
        $region17: #{tpu_custom_call.1} parent=11 // pred_check
          %p151 = pneg %p107
        $region18: #{tpu_custom_call.1} parent=11 // pred_check_branch
          %153 = sbr.rel (%p151) target = $region20
        $region19: #{tpu_custom_call.1} parent=11 // pred_region
          _
        $region20: #{tpu_custom_call.1} parent=11 // pred_fallthru
          _
      $region12: #{tpu_custom_call.1} parent=5 // pred_fallthru
        _
      %p154 = scmp.lt.s32.totalorder %s13, 2
      // Predicated region
      $region21: #{tpu_custom_call.1} parent=5 // pred_check
        %p155 = pneg %p154
      $region22: #{tpu_custom_call.1} parent=5 // pred_check_branch
        %157 = sbr.rel (%p155) target = $region24
      $region23: #{tpu_custom_call.1} parent=5 // pred_region
        // Predicated region
        $region25: #{tpu_custom_call.1} parent=23 // pred_check
          %p158 = pneg %p33
        $region26: #{tpu_custom_call.1} parent=23 // pred_check_branch
          %160 = sbr.rel (%p158) target = $region28
        $region27: #{tpu_custom_call.1} parent=23 // pred_region
          %s161 = smul.u32 8, %s13
          %p162 = scmp.lt.s32.totalorder %s161, 15
          %s163 = scalar_select %p162, %s161, 15
          %s164 = smul.addr %s163, 5
          %s165 = smul.addr %s164, 4
          %s166 = scalar_lea.vmem %s0, %s165
          %s167 = smul.u32 8, %s13
        $region28: #{tpu_custom_call.1} parent=23 // pred_fallthru
          _
        // Predicated region
        $region29: #{tpu_custom_call.1} parent=23 // pred_check
          %p168 = pneg %p59
        $region30: #{tpu_custom_call.1} parent=23 // pred_check_branch
          %170 = sbr.rel (%p168) target = $region32
        $region31: #{tpu_custom_call.1} parent=23 // pred_region
          %p171 = scmp.lt.s32.totalorder %s13, 1
          %s172 = scalar_select %p171, %s13, 1
          %s173 = smul.addr %s172, 8
          %s174 = scalar_lea.vmem %s1, %s173
        $region32: #{tpu_custom_call.1} parent=23 // pred_fallthru
          _
      $region24: #{tpu_custom_call.1} parent=5 // pred_fallthru
        _
      %p175 = scmp.le.s32.totalorder 1, %s13
      %p176 = scmp.lt.s32.totalorder %s13, 3
      %p177 = pnand %p175, %p176
      %p178 = pneg %p177
      // Predicated region
      $region33: #{tpu_custom_call.1} parent=5 // pred_check
        _
      $region34: #{tpu_custom_call.1} parent=5 // pred_check_branch
        %180 = sbr.rel (%p177) target = $region36
      $region35: #{tpu_custom_call.1} parent=5 // pred_region
        %s181 = ssub.s32 %s13, 1
        %s182 = smul.u32 8, %s18
        %p183 = scmp.lt.s32.totalorder %s182, 15
        %s184 = scalar_select %p183, %s182, 15
        %s185 = smul.addr %s184, 5
        %s186 = smul.addr %s185, 4
        %s187 = scalar_lea.vmem %s0, %s186
        %p188 = pneg %p39
        %p189 = pneg %p36
        %p190 = scmp.lt.s32.totalorder %s18, 1
        %s191 = scalar_select %p190, %s18, 1
        %s192 = smul.addr %s191, 8
        %s193 = scalar_lea.vmem %s1, %s192
        %p194 = pneg %p65
        %p195 = pneg %p62
        %p196 = pneg %p86
        %p197 = pneg %p83
        %p198 = pneg %p107
        %p199 = pneg %p104
        %p200 = pneg %p133
        %p201 = pneg %p130
        %s202 = sand.u32 %s120, 1
        %s203 = scalar_lea.sflag [#allocation3], %s202
        %s204 = sand.u32 %s120, 1
        %s205 = smul.addr %s204, 8
        %s206 = scalar_lea.vmem [#allocation2], %s205
        %s207 = smul.u32 8, %s18
        %p208 = scmp.lt.s32.totalorder %s207, 15
        %s209 = scalar_select %p208, %s207, 15
        %s210 = smul.addr %s209, 5
        %s211 = smul.addr %s210, 4
        %s212 = scalar_lea.vmem %s0, %s211
        %s213 = smul.u32 8, %s18
        %p214 = scmp.lt.s32.totalorder %s18, 1
        %s215 = scalar_select %p214, %s18, 1
        %s216 = smul.addr %s215, 8
        %s217 = scalar_lea.vmem %s1, %s216
        %v219 = vld [vmem:[%s212] sm:$0xf]
        %v220 = vld [vmem:[%s212 + $0x4] sm:$0xf]
        %v221 = vld [vmem:[%s212 + $0x8] sm:$0xf]
        %v222 = vld [vmem:[%s212 + $0xc] sm:$0xf]
        %v223 = vld [vmem:[%s212 + $0x10] sm:$0xf]
        %v224 = vld [vmem:[%s212 + $0x14] sm:$0xf]
        %v225 = vld [vmem:[%s212 + $0x18] sm:$0xf]
        %v226 = vld [vmem:[%s212 + $0x1c] sm:$0xf]
        %v227 = vld [vmem:[%s212 + $0x20] sm:$0xf]
        %v228 = vld [vmem:[%s212 + $0x24] sm:$0xf]
        %v229 = vld [vmem:[%s212 + $0x28] sm:$0xf]
        %v230 = vld [vmem:[%s212 + $0x2c] sm:$0xf]
        %v231 = vld [vmem:[%s212 + $0x30] sm:$0xf]
        %v232 = vld [vmem:[%s212 + $0x34] sm:$0xf]
        %v233 = vld [vmem:[%s212 + $0x38] sm:$0xf]
        %v234 = vld [vmem:[%s212 + $0x3c] sm:$0xf]
        %v235 = vld [vmem:[%s212 + $0x40] sm:$0xf]
        %v236 = vld [vmem:[%s212 + $0x44] sm:$0xf]
        %v237 = vld [vmem:[%s212 + $0x48] sm:$0xf]
        %v238 = vld [vmem:[%s212 + $0x4c] sm:$0xf]
        %v239 = vld [vmem:[%s212 + $0x50] sm:$0xf]
        %v240 = vld [vmem:[%s212 + $0x54] sm:$0xf]
        %v241 = vld [vmem:[%s212 + $0x58] sm:$0xf]
        %v242 = vld [vmem:[%s212 + $0x5c] sm:$0xf]
        %v243 = vld [vmem:[%s212 + $0x60] sm:$0xf]
        %v244 = vld [vmem:[%s212 + $0x64] sm:$0xf]
        %v245 = vld [vmem:[%s212 + $0x68] sm:$0xf]
        %v246 = vld [vmem:[%s212 + $0x6c] sm:$0xf]
        %v247 = vld [vmem:[%s212 + $0x70] sm:$0xf]
        %v248 = vld [vmem:[%s212 + $0x74] sm:$0xf]
        %v249 = vld [vmem:[%s212 + $0x78] sm:$0xf]
        %v250 = vld [vmem:[%s212 + $0x7c] sm:$0xf]
        %v251 = vld [vmem:[%s212 + $0x80] sm:$0xf]
        %v252 = vld [vmem:[%s212 + $0x84] sm:$0xf]
        %v253 = vld [vmem:[%s212 + $0x88] sm:$0xf]
        %v254 = vld [vmem:[%s212 + $0x8c] sm:$0xf]
        %v255 = vld [vmem:[%s212 + $0x90] sm:$0xf]
        %v256 = vld [vmem:[%s212 + $0x94] sm:$0xf]
        %v257 = vld [vmem:[%s212 + $0x98] sm:$0xf]
        %v258 = vld [vmem:[%s212 + $0x9c] sm:$0xf]
        %v259 = vld [vmem:[%s2] sm:$0xf]
        %v260 = vld [vmem:[%s2 + $0x4] sm:$0xf]
        %v301 = vunpack.c.l.b16 %v219
        %v302 = vunpack.c.l.b16 %v220
        %v303 = vunpack.c.l.b16 %v221
        %v304 = vunpack.c.l.b16 %v222
        %v305 = vunpack.c.l.b16 %v223
        %v306 = vunpack.c.l.b16 %v224
        %v307 = vunpack.c.l.b16 %v225
        %v308 = vunpack.c.l.b16 %v226
        %v309 = vunpack.c.l.b16 %v227
        %v310 = vunpack.c.l.b16 %v228
        %v311 = vunpack.c.l.b16 %v229
        %v312 = vunpack.c.l.b16 %v230
        %v313 = vunpack.c.l.b16 %v231
        %v314 = vunpack.c.l.b16 %v232
        %v315 = vunpack.c.l.b16 %v233
        %v316 = vunpack.c.l.b16 %v234
        %v317 = vunpack.c.l.b16 %v235
        %v318 = vunpack.c.l.b16 %v236
        %v319 = vunpack.c.l.b16 %v237
        %v320 = vunpack.c.l.b16 %v238
        %v321 = vunpack.c.l.b16 %v239
        %v322 = vunpack.c.l.b16 %v240
        %v323 = vunpack.c.l.b16 %v241
        %v324 = vunpack.c.l.b16 %v242
        %v325 = vunpack.c.l.b16 %v243
        %v326 = vunpack.c.l.b16 %v244
        %v327 = vunpack.c.l.b16 %v245
        %v328 = vunpack.c.l.b16 %v246
        %v329 = vunpack.c.l.b16 %v247
        %v330 = vunpack.c.l.b16 %v248
        %v331 = vunpack.c.l.b16 %v249
        %v332 = vunpack.c.l.b16 %v250
        %v333 = vunpack.c.l.b16 %v251
        %v334 = vunpack.c.l.b16 %v252
        %v335 = vunpack.c.l.b16 %v253
        %v336 = vunpack.c.l.b16 %v254
        %v337 = vunpack.c.l.b16 %v255
        %v338 = vunpack.c.l.b16 %v256
        %v339 = vunpack.c.l.b16 %v257
        %v340 = vunpack.c.l.b16 %v258
        %v341 = vpack.c.b16 %v302, %v301
        %v342 = vpack.c.b16 %v304, %v303
        %v343 = vpack.c.b16 %v306, %v305
        %v344 = vpack.c.b16 %v308, %v307
        %v345 = vpack.c.b16 %v310, %v309
        %v346 = vpack.c.b16 %v312, %v311
        %v347 = vpack.c.b16 %v314, %v313
        %v348 = vpack.c.b16 %v316, %v315
        %v349 = vpack.c.b16 %v318, %v317
        %v350 = vpack.c.b16 %v320, %v319
        %v351 = vpack.c.b16 %v322, %v321
        %v352 = vpack.c.b16 %v324, %v323
        %v353 = vpack.c.b16 %v326, %v325
        %v354 = vpack.c.b16 %v328, %v327
        %v355 = vpack.c.b16 %v330, %v329
        %v356 = vpack.c.b16 %v332, %v331
        %v357 = vpack.c.b16 %v334, %v333
        %v358 = vpack.c.b16 %v336, %v335
        %v359 = vpack.c.b16 %v338, %v337
        %v360 = vpack.c.b16 %v340, %v339
        %v363 = vunpack.c.l.b16 %v259
        %v364 = vunpack.c.l.b16 %v260
        %v365 = vpack.c.b16 %v364, %v363
        %vm367 = vcmask 130048
        %v369 = vsel %vm367, %v341, 0
        %v372 = vsel %vm367, %v342, 0
        %v375 = vsel %vm367, %v343, 0
        %v378 = vsel %vm367, %v344, 0
        %v381 = vsel %vm367, %v345, 0
        %v384 = vsel %vm367, %v346, 0
        %v387 = vsel %vm367, %v347, 0
        %v390 = vsel %vm367, %v348, 0
        %v393 = vsel %vm367, %v349, 0
        %v396 = vsel %vm367, %v350, 0
        %v399 = vsel %vm367, %v351, 0
        %v402 = vsel %vm367, %v352, 0
        %v405 = vsel %vm367, %v353, 0
        %v408 = vsel %vm367, %v354, 0
        %v411 = vsel %vm367, %v355, 0
        %v414 = vsel %vm367, %v356, 0
        %v417 = vsel %vm367, %v357, 0
        %v420 = vsel %vm367, %v358, 0
        %v423 = vsel %vm367, %v359, 0
        %v426 = vsel %vm367, %v360, 0
        %428 = vmatpush.bf16.msra.mxu0 0
        %429 = vmatpush.bf16.msra.mxu0 0
        %430 = vmatpush.bf16.msra.mxu0 0
        %431 = vmatpush.bf16.msra.mxu0 0
        %432 = vmatpush.bf16.msra.mxu0 0
        %433 = vmatpush.bf16.msra.mxu0 0
        %434 = vmatpush.bf16.msra.mxu0 0
        %435 = vmatpush.bf16.msra.mxu0 %v365
        %436 = vmatmul.bf16.gmra.mxu0 %v369
        %v437 = vpop.f32.mrf.mxu0
        %v438 = vadd.f32 0.0, %v437
        %v439 = vpop.f32.mrf.mxu0
        %v440 = vadd.f32 0.0, %v439
        %441 = vmatmul.bf16.gmra.mxu0 %v372
        %v442 = vpop.f32.mrf.mxu0
        %v443 = vadd.f32 0.0, %v442
        %v444 = vpop.f32.mrf.mxu0
        %v445 = vadd.f32 0.0, %v444
        %446 = vmatmul.bf16.gmra.mxu0 %v375
        %v447 = vpop.f32.mrf.mxu0
        %v448 = vadd.f32 0.0, %v447
        %v449 = vpop.f32.mrf.mxu0
        %v450 = vadd.f32 0.0, %v449
        %451 = vmatmul.bf16.gmra.mxu0 %v378
        %v452 = vpop.f32.mrf.mxu0
        %v453 = vadd.f32 0.0, %v452
        %v454 = vpop.f32.mrf.mxu0
        %v455 = vadd.f32 0.0, %v454
        %456 = vmatmul.bf16.gmra.mxu0 %v381
        %v457 = vpop.f32.mrf.mxu0
        %v458 = vadd.f32 0.0, %v457
        %v459 = vpop.f32.mrf.mxu0
        %v460 = vadd.f32 0.0, %v459
        %461 = vmatmul.bf16.gmra.mxu0 %v384
        %v462 = vpop.f32.mrf.mxu0
        %v463 = vadd.f32 0.0, %v462
        %v464 = vpop.f32.mrf.mxu0
        %v465 = vadd.f32 0.0, %v464
        %466 = vmatmul.bf16.gmra.mxu0 %v387
        %v467 = vpop.f32.mrf.mxu0
        %v468 = vadd.f32 0.0, %v467
        %v469 = vpop.f32.mrf.mxu0
        %v470 = vadd.f32 0.0, %v469
        %471 = vmatmul.bf16.gmra.mxu0 %v390
        %v472 = vpop.f32.mrf.mxu0
        %v473 = vadd.f32 0.0, %v472
        %v474 = vpop.f32.mrf.mxu0
        %v475 = vadd.f32 0.0, %v474
        %476 = vmatmul.bf16.gmra.mxu0 %v393
        %v477 = vpop.f32.mrf.mxu0
        %v478 = vadd.f32 0.0, %v477
        %v479 = vpop.f32.mrf.mxu0
        %v480 = vadd.f32 0.0, %v479
        %481 = vmatmul.bf16.gmra.mxu0 %v396
        %v482 = vpop.f32.mrf.mxu0
        %v483 = vadd.f32 0.0, %v482
        %v484 = vpop.f32.mrf.mxu0
        %v485 = vadd.f32 0.0, %v484
        %486 = vmatmul.bf16.gmra.mxu0 %v399
        %v487 = vpop.f32.mrf.mxu0
        %v488 = vadd.f32 0.0, %v487
        %v489 = vpop.f32.mrf.mxu0
        %v490 = vadd.f32 0.0, %v489
        %491 = vmatmul.bf16.gmra.mxu0 %v402
        %v492 = vpop.f32.mrf.mxu0
        %v493 = vadd.f32 0.0, %v492
        %v494 = vpop.f32.mrf.mxu0
        %v495 = vadd.f32 0.0, %v494
        %496 = vmatmul.bf16.gmra.mxu0 %v405
        %v497 = vpop.f32.mrf.mxu0
        %v498 = vadd.f32 0.0, %v497
        %v499 = vpop.f32.mrf.mxu0
        %v500 = vadd.f32 0.0, %v499
        %501 = vmatmul.bf16.gmra.mxu0 %v408
        %v502 = vpop.f32.mrf.mxu0
        %v503 = vadd.f32 0.0, %v502
        %v504 = vpop.f32.mrf.mxu0
        %v505 = vadd.f32 0.0, %v504
        %506 = vmatmul.bf16.gmra.mxu0 %v411
        %v507 = vpop.f32.mrf.mxu0
        %v508 = vadd.f32 0.0, %v507
        %v509 = vpop.f32.mrf.mxu0
        %v510 = vadd.f32 0.0, %v509
        %511 = vmatmul.bf16.gmra.mxu0 %v414
        %v512 = vpop.f32.mrf.mxu0
        %v513 = vadd.f32 0.0, %v512
        %v514 = vpop.f32.mrf.mxu0
        %v515 = vadd.f32 0.0, %v514
        %516 = vmatmul.bf16.gmra.mxu0 %v417
        %v517 = vpop.f32.mrf.mxu0
        %v518 = vadd.f32 0.0, %v517
        %v519 = vpop.f32.mrf.mxu0
        %v520 = vadd.f32 0.0, %v519
        %521 = vmatmul.bf16.gmra.mxu0 %v420
        %v522 = vpop.f32.mrf.mxu0
        %v523 = vadd.f32 0.0, %v522
        %v524 = vpop.f32.mrf.mxu0
        %v525 = vadd.f32 0.0, %v524
        %526 = vmatmul.bf16.gmra.mxu0 %v423
        %v527 = vpop.f32.mrf.mxu0
        %v528 = vadd.f32 0.0, %v527
        %v529 = vpop.f32.mrf.mxu0
        %v530 = vadd.f32 0.0, %v529
        %531 = vmatmul.bf16.gmra.mxu0 %v426
        %v532 = vpop.f32.mrf.mxu0
        %v533 = vadd.f32 0.0, %v532
        %v534 = vpop.f32.mrf.mxu0
        %v535 = vadd.f32 0.0, %v534
        %536 = vdwg.mxu0
        %v537 = vld [vmem:[%s217] sm:$0xff]
        %v539 = vrot.slane %v537, 1
        %v540 = vrot.slane %v537, 2
        %v541 = vrot.slane %v537, 3
        %v542 = vrot.slane %v537, 4
        %v543 = vrot.slane %v537, 5
        %v544 = vrot.slane %v537, 6
        %v545 = vrot.slane %v537, 7
        %v546 = vperm.slane %v537, 0
        %v547 = vperm.slane %v539, 0
        %v548 = vperm.slane %v540, 0
        %v549 = vperm.slane %v541, 0
        %v550 = vperm.slane %v542, 0
        %v551 = vperm.slane %v543, 0
        %v552 = vperm.slane %v544, 0
        %v553 = vperm.slane %v545, 0
        %v562 = vadd.f32 %v438, %v546
        %v563 = vadd.f32 %v440, %v546
        %v564 = vadd.f32 %v443, %v546
        %v565 = vadd.f32 %v445, %v546
        %v566 = vadd.f32 %v448, %v546
        %v567 = vadd.f32 %v450, %v547
        %v568 = vadd.f32 %v453, %v547
        %v569 = vadd.f32 %v455, %v547
        %v570 = vadd.f32 %v458, %v547
        %v571 = vadd.f32 %v460, %v547
        %v572 = vadd.f32 %v463, %v548
        %v573 = vadd.f32 %v465, %v548
        %v574 = vadd.f32 %v468, %v548
        %v575 = vadd.f32 %v470, %v548
        %v576 = vadd.f32 %v473, %v548
        %v577 = vadd.f32 %v475, %v549
        %v578 = vadd.f32 %v478, %v549
        %v579 = vadd.f32 %v480, %v549
        %v580 = vadd.f32 %v483, %v549
        %v581 = vadd.f32 %v485, %v549
        %v582 = vadd.f32 %v488, %v550
        %v583 = vadd.f32 %v490, %v550
        %v584 = vadd.f32 %v493, %v550
        %v585 = vadd.f32 %v495, %v550
        %v586 = vadd.f32 %v498, %v550
        %v587 = vadd.f32 %v500, %v551
        %v588 = vadd.f32 %v503, %v551
        %v589 = vadd.f32 %v505, %v551
        %v590 = vadd.f32 %v508, %v551
        %v591 = vadd.f32 %v510, %v551
        %v592 = vadd.f32 %v513, %v552
        %v593 = vadd.f32 %v515, %v552
        %v594 = vadd.f32 %v518, %v552
        %v595 = vadd.f32 %v520, %v552
        %v596 = vadd.f32 %v523, %v552
        %v597 = vadd.f32 %v525, %v553
        %v598 = vadd.f32 %v528, %v553
        %v599 = vadd.f32 %v530, %v553
        %v600 = vadd.f32 %v533, %v553
        %v601 = vadd.f32 %v535, %v553
        %v602 = vtanh.pop %v562
        %v603 = vtanh.pop %v563
        %v604 = vtanh.pop %v564
        %v605 = vtanh.pop %v565
        %v606 = vtanh.pop %v566
        %v607 = vtanh.pop %v567
        %v608 = vtanh.pop %v568
        %v609 = vtanh.pop %v569
        %v610 = vtanh.pop %v570
        %v611 = vtanh.pop %v571
        %v612 = vtanh.pop %v572
        %v613 = vtanh.pop %v573
        %v614 = vtanh.pop %v574
        %v615 = vtanh.pop %v575
        %v616 = vtanh.pop %v576
        %v617 = vtanh.pop %v577
        %v618 = vtanh.pop %v578
        %v619 = vtanh.pop %v579
        %v620 = vtanh.pop %v580
        %v621 = vtanh.pop %v581
        %v622 = vtanh.pop %v582
        %v623 = vtanh.pop %v583
        %v624 = vtanh.pop %v584
        %v625 = vtanh.pop %v585
        %v626 = vtanh.pop %v586
        %v627 = vtanh.pop %v587
        %v628 = vtanh.pop %v588
        %v629 = vtanh.pop %v589
        %v630 = vtanh.pop %v590
        %v631 = vtanh.pop %v591
        %v632 = vtanh.pop %v592
        %v633 = vtanh.pop %v593
        %v634 = vtanh.pop %v594
        %v635 = vtanh.pop %v595
        %v636 = vtanh.pop %v596
        %v637 = vtanh.pop %v597
        %v638 = vtanh.pop %v598
        %v639 = vtanh.pop %v599
        %v640 = vtanh.pop %v600
        %v641 = vtanh.pop %v601
        %v642 = vmul.f32 %v602, 0.5
        %v643 = vmul.f32 %v603, 0.5
        %v644 = vmul.f32 %v604, 0.5
        %v645 = vmul.f32 %v605, 0.5
        %v646 = vmul.f32 %v606, 0.5
        %v647 = vmul.f32 %v607, 0.5
        %v648 = vmul.f32 %v608, 0.5
        %v649 = vmul.f32 %v609, 0.5
        %v650 = vmul.f32 %v610, 0.5
        %v651 = vmul.f32 %v611, 0.5
        %v652 = vmul.f32 %v612, 0.5
        %v653 = vmul.f32 %v613, 0.5
        %v654 = vmul.f32 %v614, 0.5
        %v655 = vmul.f32 %v615, 0.5
        %v656 = vmul.f32 %v616, 0.5
        %v657 = vmul.f32 %v617, 0.5
        %v658 = vmul.f32 %v618, 0.5
        %v659 = vmul.f32 %v619, 0.5
        %v660 = vmul.f32 %v620, 0.5
        %v661 = vmul.f32 %v621, 0.5
        %v662 = vmul.f32 %v622, 0.5
        %v663 = vmul.f32 %v623, 0.5
        %v664 = vmul.f32 %v624, 0.5
        %v665 = vmul.f32 %v625, 0.5
        %v666 = vmul.f32 %v626, 0.5
        %v667 = vmul.f32 %v627, 0.5
        %v668 = vmul.f32 %v628, 0.5
        %v669 = vmul.f32 %v629, 0.5
        %v670 = vmul.f32 %v630, 0.5
        %v671 = vmul.f32 %v631, 0.5
        %v672 = vmul.f32 %v632, 0.5
        %v673 = vmul.f32 %v633, 0.5
        %v674 = vmul.f32 %v634, 0.5
        %v675 = vmul.f32 %v635, 0.5
        %v676 = vmul.f32 %v636, 0.5
        %v677 = vmul.f32 %v637, 0.5
        %v678 = vmul.f32 %v638, 0.5
        %v679 = vmul.f32 %v639, 0.5
        %v680 = vmul.f32 %v640, 0.5
        %v681 = vmul.f32 %v641, 0.5
        %v682 = vadd.f32 %v642, 0.5
        %v683 = vadd.f32 %v643, 0.5
        %v684 = vadd.f32 %v644, 0.5
        %v685 = vadd.f32 %v645, 0.5
        %v686 = vadd.f32 %v646, 0.5
        %v687 = vadd.f32 %v647, 0.5
        %v688 = vadd.f32 %v648, 0.5
        %v689 = vadd.f32 %v649, 0.5
        %v690 = vadd.f32 %v650, 0.5
        %v691 = vadd.f32 %v651, 0.5
        %v692 = vadd.f32 %v652, 0.5
        %v693 = vadd.f32 %v653, 0.5
        %v694 = vadd.f32 %v654, 0.5
        %v695 = vadd.f32 %v655, 0.5
        %v696 = vadd.f32 %v656, 0.5
        %v697 = vadd.f32 %v657, 0.5
        %v698 = vadd.f32 %v658, 0.5
        %v699 = vadd.f32 %v659, 0.5
        %v700 = vadd.f32 %v660, 0.5
        %v701 = vadd.f32 %v661, 0.5
        %v702 = vadd.f32 %v662, 0.5
        %v703 = vadd.f32 %v663, 0.5
        %v704 = vadd.f32 %v664, 0.5
        %v705 = vadd.f32 %v665, 0.5
        %v706 = vadd.f32 %v666, 0.5
        %v707 = vadd.f32 %v667, 0.5
        %v708 = vadd.f32 %v668, 0.5
        %v709 = vadd.f32 %v669, 0.5
        %v710 = vadd.f32 %v670, 0.5
        %v711 = vadd.f32 %v671, 0.5
        %v712 = vadd.f32 %v672, 0.5
        %v713 = vadd.f32 %v673, 0.5
        %v714 = vadd.f32 %v674, 0.5
        %v715 = vadd.f32 %v675, 0.5
        %v716 = vadd.f32 %v676, 0.5
        %v717 = vadd.f32 %v677, 0.5
        %v718 = vadd.f32 %v678, 0.5
        %v719 = vadd.f32 %v679, 0.5
        %v720 = vadd.f32 %v680, 0.5
        %v721 = vadd.f32 %v681, 0.5
        %762 = vrot.lane.b32.xlu0 %v682, 96
        %v763 = vpop.permute.xlu0 %762
        %764 = vrot.lane.b32.xlu0 %v683, 96
        %v765 = vpop.permute.xlu0 %764
        %766 = vrot.lane.b32.xlu0 %v684, 96
        %v767 = vpop.permute.xlu0 %766
        %768 = vrot.lane.b32.xlu0 %v685, 96
        %v769 = vpop.permute.xlu0 %768
        %770 = vrot.lane.b32.xlu0 %v686, 96
        %v771 = vpop.permute.xlu0 %770
        %772 = vrot.lane.b32.xlu0 %v687, 96
        %v773 = vpop.permute.xlu0 %772
        %774 = vrot.lane.b32.xlu0 %v688, 96
        %v775 = vpop.permute.xlu0 %774
        %776 = vrot.lane.b32.xlu0 %v689, 96
        %v777 = vpop.permute.xlu0 %776
        %778 = vrot.lane.b32.xlu0 %v690, 96
        %v779 = vpop.permute.xlu0 %778
        %780 = vrot.lane.b32.xlu0 %v691, 96
        %v781 = vpop.permute.xlu0 %780
        %782 = vrot.lane.b32.xlu0 %v692, 96
        %v783 = vpop.permute.xlu0 %782
        %784 = vrot.lane.b32.xlu0 %v693, 96
        %v785 = vpop.permute.xlu0 %784
        %786 = vrot.lane.b32.xlu0 %v694, 96
        %v787 = vpop.permute.xlu0 %786
        %788 = vrot.lane.b32.xlu0 %v695, 96
        %v789 = vpop.permute.xlu0 %788
        %790 = vrot.lane.b32.xlu0 %v696, 96
        %v791 = vpop.permute.xlu0 %790
        %792 = vrot.lane.b32.xlu0 %v697, 96
        %v793 = vpop.permute.xlu0 %792
        %794 = vrot.lane.b32.xlu0 %v698, 96
        %v795 = vpop.permute.xlu0 %794
        %796 = vrot.lane.b32.xlu0 %v699, 96
        %v797 = vpop.permute.xlu0 %796
        %798 = vrot.lane.b32.xlu0 %v700, 96
        %v799 = vpop.permute.xlu0 %798
        %800 = vrot.lane.b32.xlu0 %v701, 96
        %v801 = vpop.permute.xlu0 %800
        %802 = vrot.lane.b32.xlu0 %v702, 96
        %v803 = vpop.permute.xlu0 %802
        %804 = vrot.lane.b32.xlu0 %v703, 96
        %v805 = vpop.permute.xlu0 %804
        %806 = vrot.lane.b32.xlu0 %v704, 96
        %v807 = vpop.permute.xlu0 %806
        %808 = vrot.lane.b32.xlu0 %v705, 96
        %v809 = vpop.permute.xlu0 %808
        %810 = vrot.lane.b32.xlu0 %v706, 96
        %v811 = vpop.permute.xlu0 %810
        %812 = vrot.lane.b32.xlu0 %v707, 96
        %v813 = vpop.permute.xlu0 %812
        %814 = vrot.lane.b32.xlu0 %v708, 96
        %v815 = vpop.permute.xlu0 %814
        %816 = vrot.lane.b32.xlu0 %v709, 96
        %v817 = vpop.permute.xlu0 %816
        %818 = vrot.lane.b32.xlu0 %v710, 96
        %v819 = vpop.permute.xlu0 %818
        %820 = vrot.lane.b32.xlu0 %v711, 96
        %v821 = vpop.permute.xlu0 %820
        %822 = vrot.lane.b32.xlu0 %v712, 96
        %v823 = vpop.permute.xlu0 %822
        %824 = vrot.lane.b32.xlu0 %v713, 96
        %v825 = vpop.permute.xlu0 %824
        %826 = vrot.lane.b32.xlu0 %v714, 96
        %v827 = vpop.permute.xlu0 %826
        %828 = vrot.lane.b32.xlu0 %v715, 96
        %v829 = vpop.permute.xlu0 %828
        %830 = vrot.lane.b32.xlu0 %v716, 96
        %v831 = vpop.permute.xlu0 %830
        %832 = vrot.lane.b32.xlu0 %v717, 96
        %v833 = vpop.permute.xlu0 %832
        %834 = vrot.lane.b32.xlu0 %v718, 96
        %v835 = vpop.permute.xlu0 %834
        %836 = vrot.lane.b32.xlu0 %v719, 96
        %v837 = vpop.permute.xlu0 %836
        %838 = vrot.lane.b32.xlu0 %v720, 96
        %v839 = vpop.permute.xlu0 %838
        %840 = vrot.lane.b32.xlu0 %v721, 96
        %v841 = vpop.permute.xlu0 %840
        %v882 = vmul.f32 %v602, %v763
        %v883 = vmul.f32 %v603, %v765
        %v884 = vmul.f32 %v604, %v767
        %v885 = vmul.f32 %v605, %v769
        %v886 = vmul.f32 %v606, %v771
        %v887 = vmul.f32 %v607, %v773
        %v888 = vmul.f32 %v608, %v775
        %v889 = vmul.f32 %v609, %v777
        %v890 = vmul.f32 %v610, %v779
        %v891 = vmul.f32 %v611, %v781
        %v892 = vmul.f32 %v612, %v783
        %v893 = vmul.f32 %v613, %v785
        %v894 = vmul.f32 %v614, %v787
        %v895 = vmul.f32 %v615, %v789
        %v896 = vmul.f32 %v616, %v791
        %v897 = vmul.f32 %v617, %v793
        %v898 = vmul.f32 %v618, %v795
        %v899 = vmul.f32 %v619, %v797
        %v900 = vmul.f32 %v620, %v799
        %v901 = vmul.f32 %v621, %v801
        %v902 = vmul.f32 %v622, %v803
        %v903 = vmul.f32 %v623, %v805
        %v904 = vmul.f32 %v624, %v807
        %v905 = vmul.f32 %v625, %v809
        %v906 = vmul.f32 %v626, %v811
        %v907 = vmul.f32 %v627, %v813
        %v908 = vmul.f32 %v628, %v815
        %v909 = vmul.f32 %v629, %v817
        %v910 = vmul.f32 %v630, %v819
        %v911 = vmul.f32 %v631, %v821
        %v912 = vmul.f32 %v632, %v823
        %v913 = vmul.f32 %v633, %v825
        %v914 = vmul.f32 %v634, %v827
        %v915 = vmul.f32 %v635, %v829
        %v916 = vmul.f32 %v636, %v831
        %v917 = vmul.f32 %v637, %v833
        %v918 = vmul.f32 %v638, %v835
        %v919 = vmul.f32 %v639, %v837
        %v920 = vmul.f32 %v640, %v839
        %v921 = vmul.f32 %v641, %v841
        %v922 = vld [vmem:[%s3] sm:$0x1]
        %v924 = vperm.slane %v922, 0
        %v926 = vmul.f32 %v882, %v924
        %v927 = vmul.f32 %v883, %v924
        %v928 = vmul.f32 %v884, %v924
        %v929 = vmul.f32 %v885, %v924
        %v930 = vmul.f32 %v886, %v924
        %v931 = vmul.f32 %v887, %v924
        %v932 = vmul.f32 %v888, %v924
        %v933 = vmul.f32 %v889, %v924
        %v934 = vmul.f32 %v890, %v924
        %v935 = vmul.f32 %v891, %v924
        %v936 = vmul.f32 %v892, %v924
        %v937 = vmul.f32 %v893, %v924
        %v938 = vmul.f32 %v894, %v924
        %v939 = vmul.f32 %v895, %v924
        %v940 = vmul.f32 %v896, %v924
        %v941 = vmul.f32 %v897, %v924
        %v942 = vmul.f32 %v898, %v924
        %v943 = vmul.f32 %v899, %v924
        %v944 = vmul.f32 %v900, %v924
        %v945 = vmul.f32 %v901, %v924
        %v946 = vmul.f32 %v902, %v924
        %v947 = vmul.f32 %v903, %v924
        %v948 = vmul.f32 %v904, %v924
        %v949 = vmul.f32 %v905, %v924
        %v950 = vmul.f32 %v906, %v924
        %v951 = vmul.f32 %v907, %v924
        %v952 = vmul.f32 %v908, %v924
        %v953 = vmul.f32 %v909, %v924
        %v954 = vmul.f32 %v910, %v924
        %v955 = vmul.f32 %v911, %v924
        %v956 = vmul.f32 %v912, %v924
        %v957 = vmul.f32 %v913, %v924
        %v958 = vmul.f32 %v914, %v924
        %v959 = vmul.f32 %v915, %v924
        %v960 = vmul.f32 %v916, %v924
        %v961 = vmul.f32 %v917, %v924
        %v962 = vmul.f32 %v918, %v924
        %v963 = vmul.f32 %v919, %v924
        %v964 = vmul.f32 %v920, %v924
        %v965 = vmul.f32 %v921, %v924
        %vm966 = vcmask 261120
        %v967 = vsel %vm966, %v926, 0.0
        %968 = vadd.xlane.f32.xlu0 %v967
        %v969 = vpop.xlane.xlu0 %968
        %v970 = vsel %vm966, %v927, 0.0
        %971 = vadd.xlane.f32.xlu0 %v970
        %v972 = vpop.xlane.xlu0 %971
        %v973 = vsel %vm966, %v928, 0.0
        %974 = vadd.xlane.f32.xlu0 %v973
        %v975 = vpop.xlane.xlu0 %974
        %v976 = vsel %vm966, %v929, 0.0
        %977 = vadd.xlane.f32.xlu0 %v976
        %v978 = vpop.xlane.xlu0 %977
        %v979 = vsel %vm966, %v930, 0.0
        %980 = vadd.xlane.f32.xlu0 %v979
        %v981 = vpop.xlane.xlu0 %980
        %v982 = vsel %vm966, %v931, 0.0
        %983 = vadd.xlane.f32.xlu0 %v982
        %v984 = vpop.xlane.xlu0 %983
        %v985 = vsel %vm966, %v932, 0.0
        %986 = vadd.xlane.f32.xlu0 %v985
        %v987 = vpop.xlane.xlu0 %986
        %v988 = vsel %vm966, %v933, 0.0
        %989 = vadd.xlane.f32.xlu0 %v988
        %v990 = vpop.xlane.xlu0 %989
        %v991 = vsel %vm966, %v934, 0.0
        %992 = vadd.xlane.f32.xlu0 %v991
        %v993 = vpop.xlane.xlu0 %992
        %v994 = vsel %vm966, %v935, 0.0
        %995 = vadd.xlane.f32.xlu0 %v994
        %v996 = vpop.xlane.xlu0 %995
        %v997 = vsel %vm966, %v936, 0.0
        %998 = vadd.xlane.f32.xlu0 %v997
        %v999 = vpop.xlane.xlu0 %998
        %v1000 = vsel %vm966, %v937, 0.0
        %1001 = vadd.xlane.f32.xlu0 %v1000
        %v1002 = vpop.xlane.xlu0 %1001
        %v1003 = vsel %vm966, %v938, 0.0
        %1004 = vadd.xlane.f32.xlu0 %v1003
        %v1005 = vpop.xlane.xlu0 %1004
        %v1006 = vsel %vm966, %v939, 0.0
        %1007 = vadd.xlane.f32.xlu0 %v1006
        %v1008 = vpop.xlane.xlu0 %1007
        %v1009 = vsel %vm966, %v940, 0.0
        %1010 = vadd.xlane.f32.xlu0 %v1009
        %v1011 = vpop.xlane.xlu0 %1010
        %v1012 = vsel %vm966, %v941, 0.0
        %1013 = vadd.xlane.f32.xlu0 %v1012
        %v1014 = vpop.xlane.xlu0 %1013
        %v1015 = vsel %vm966, %v942, 0.0
        %1016 = vadd.xlane.f32.xlu0 %v1015
        %v1017 = vpop.xlane.xlu0 %1016
        %v1018 = vsel %vm966, %v943, 0.0
        %1019 = vadd.xlane.f32.xlu0 %v1018
        %v1020 = vpop.xlane.xlu0 %1019
        %v1021 = vsel %vm966, %v944, 0.0
        %1022 = vadd.xlane.f32.xlu0 %v1021
        %v1023 = vpop.xlane.xlu0 %1022
        %v1024 = vsel %vm966, %v945, 0.0
        %1025 = vadd.xlane.f32.xlu0 %v1024
        %v1026 = vpop.xlane.xlu0 %1025
        %v1027 = vsel %vm966, %v946, 0.0
        %1028 = vadd.xlane.f32.xlu0 %v1027
        %v1029 = vpop.xlane.xlu0 %1028
        %v1030 = vsel %vm966, %v947, 0.0
        %1031 = vadd.xlane.f32.xlu0 %v1030
        %v1032 = vpop.xlane.xlu0 %1031
        %v1033 = vsel %vm966, %v948, 0.0
        %1034 = vadd.xlane.f32.xlu0 %v1033
        %v1035 = vpop.xlane.xlu0 %1034
        %v1036 = vsel %vm966, %v949, 0.0
        %1037 = vadd.xlane.f32.xlu0 %v1036
        %v1038 = vpop.xlane.xlu0 %1037
        %v1039 = vsel %vm966, %v950, 0.0
        %1040 = vadd.xlane.f32.xlu0 %v1039
        %v1041 = vpop.xlane.xlu0 %1040
        %v1042 = vsel %vm966, %v951, 0.0
        %1043 = vadd.xlane.f32.xlu0 %v1042
        %v1044 = vpop.xlane.xlu0 %1043
        %v1045 = vsel %vm966, %v952, 0.0
        %1046 = vadd.xlane.f32.xlu0 %v1045
        %v1047 = vpop.xlane.xlu0 %1046
        %v1048 = vsel %vm966, %v953, 0.0
        %1049 = vadd.xlane.f32.xlu0 %v1048
        %v1050 = vpop.xlane.xlu0 %1049
        %v1051 = vsel %vm966, %v954, 0.0
        %1052 = vadd.xlane.f32.xlu0 %v1051
        %v1053 = vpop.xlane.xlu0 %1052
        %v1054 = vsel %vm966, %v955, 0.0
        %1055 = vadd.xlane.f32.xlu0 %v1054
        %v1056 = vpop.xlane.xlu0 %1055
        %v1057 = vsel %vm966, %v956, 0.0
        %1058 = vadd.xlane.f32.xlu0 %v1057
        %v1059 = vpop.xlane.xlu0 %1058
        %v1060 = vsel %vm966, %v957, 0.0
        %1061 = vadd.xlane.f32.xlu0 %v1060
        %v1062 = vpop.xlane.xlu0 %1061
        %v1063 = vsel %vm966, %v958, 0.0
        %1064 = vadd.xlane.f32.xlu0 %v1063
        %v1065 = vpop.xlane.xlu0 %1064
        %v1066 = vsel %vm966, %v959, 0.0
        %1067 = vadd.xlane.f32.xlu0 %v1066
        %v1068 = vpop.xlane.xlu0 %1067
        %v1069 = vsel %vm966, %v960, 0.0
        %1070 = vadd.xlane.f32.xlu0 %v1069
        %v1071 = vpop.xlane.xlu0 %1070
        %v1072 = vsel %vm966, %v961, 0.0
        %1073 = vadd.xlane.f32.xlu0 %v1072
        %v1074 = vpop.xlane.xlu0 %1073
        %v1075 = vsel %vm966, %v962, 0.0
        %1076 = vadd.xlane.f32.xlu0 %v1075
        %v1077 = vpop.xlane.xlu0 %1076
        %v1078 = vsel %vm966, %v963, 0.0
        %1079 = vadd.xlane.f32.xlu0 %v1078
        %v1080 = vpop.xlane.xlu0 %1079
        %v1081 = vsel %vm966, %v964, 0.0
        %1082 = vadd.xlane.f32.xlu0 %v1081
        %v1083 = vpop.xlane.xlu0 %1082
        %v1084 = vsel %vm966, %v965, 0.0
        %1085 = vadd.xlane.f32.xlu0 %v1084
        %v1086 = vpop.xlane.xlu0 %1085
        %v1087 = vlaneseq
        %v1088 = vand.u32 %v1087, 127
        %vm1089 = vcmp.lt.s32.totalorder %v1088, 36
        %v1130 = vperm.slane %v969, %v1088
        %v1131 = vadd.s32 %v1088, 4294967288
        %v1132 = vperm.slane %v972, %v1131
        %vm1133 = vcmask 130112
        %v1134 = vsel %vm1133, %v1132, %v1130
        %v1135 = vadd.s32 %v1088, 4294967280
        %v1136 = vperm.slane %v975, %v1135
        %vm1137 = vcmask 195712
        %v1138 = vsel %vm1137, %v1136, %v1134
        %v1139 = vadd.s32 %v1088, 4294967272
        %v1140 = vperm.slane %v978, %v1139
        %vm1141 = vcmask 261312
        %v1142 = vsel %vm1141, %v1140, %v1138
        %v1143 = vadd.s32 %v1088, 4294967264
        %v1144 = vperm.slane %v981, %v1143
        %vm1145 = vcmask 326912
        %v1146 = vsel %vm1145, %v1144, %v1142
        %v1147 = vperm.slane %v984, %v1088
        %v1148 = vperm.slane %v987, %v1131
        %v1149 = vsel %vm1133, %v1148, %v1147
        %v1150 = vperm.slane %v990, %v1135
        %v1151 = vsel %vm1137, %v1150, %v1149
        %v1152 = vperm.slane %v993, %v1139
        %v1153 = vsel %vm1141, %v1152, %v1151
        %v1154 = vperm.slane %v996, %v1143
        %v1155 = vsel %vm1145, %v1154, %v1153
        %v1156 = vperm.slane %v999, %v1088
        %v1157 = vperm.slane %v1002, %v1131
        %v1158 = vsel %vm1133, %v1157, %v1156
        %v1159 = vperm.slane %v1005, %v1135
        %v1160 = vsel %vm1137, %v1159, %v1158
        %v1161 = vperm.slane %v1008, %v1139
        %v1162 = vsel %vm1141, %v1161, %v1160
        %v1163 = vperm.slane %v1011, %v1143
        %v1164 = vsel %vm1145, %v1163, %v1162
        %v1165 = vperm.slane %v1014, %v1088
        %v1166 = vperm.slane %v1017, %v1131
        %v1167 = vsel %vm1133, %v1166, %v1165
        %v1168 = vperm.slane %v1020, %v1135
        %v1169 = vsel %vm1137, %v1168, %v1167
        %v1170 = vperm.slane %v1023, %v1139
        %v1171 = vsel %vm1141, %v1170, %v1169
        %v1172 = vperm.slane %v1026, %v1143
        %v1173 = vsel %vm1145, %v1172, %v1171
        %v1174 = vperm.slane %v1029, %v1088
        %v1175 = vperm.slane %v1032, %v1131
        %v1176 = vsel %vm1133, %v1175, %v1174
        %v1177 = vperm.slane %v1035, %v1135
        %v1178 = vsel %vm1137, %v1177, %v1176
        %v1179 = vperm.slane %v1038, %v1139
        %v1180 = vsel %vm1141, %v1179, %v1178
        %v1181 = vperm.slane %v1041, %v1143
        %v1182 = vsel %vm1145, %v1181, %v1180
        %v1183 = vperm.slane %v1044, %v1088
        %v1184 = vperm.slane %v1047, %v1131
        %v1185 = vsel %vm1133, %v1184, %v1183
        %v1186 = vperm.slane %v1050, %v1135
        %v1187 = vsel %vm1137, %v1186, %v1185
        %v1188 = vperm.slane %v1053, %v1139
        %v1189 = vsel %vm1141, %v1188, %v1187
        %v1190 = vperm.slane %v1056, %v1143
        %v1191 = vsel %vm1145, %v1190, %v1189
        %v1192 = vperm.slane %v1059, %v1088
        %v1193 = vperm.slane %v1062, %v1131
        %v1194 = vsel %vm1133, %v1193, %v1192
        %v1195 = vperm.slane %v1065, %v1135
        %v1196 = vsel %vm1137, %v1195, %v1194
        %v1197 = vperm.slane %v1068, %v1139
        %v1198 = vsel %vm1141, %v1197, %v1196
        %v1199 = vperm.slane %v1071, %v1143
        %v1200 = vsel %vm1145, %v1199, %v1198
        %v1201 = vperm.slane %v1074, %v1088
        %v1202 = vperm.slane %v1077, %v1131
        %v1203 = vsel %vm1133, %v1202, %v1201
        %v1204 = vperm.slane %v1080, %v1135
        %v1205 = vsel %vm1137, %v1204, %v1203
        %v1206 = vperm.slane %v1083, %v1139
        %v1207 = vsel %vm1141, %v1206, %v1205
        %v1208 = vperm.slane %v1086, %v1143
        %v1209 = vsel %vm1145, %v1208, %v1207
        %vm1210 = vcmask 1041409
        %v1211 = vsel %vm1210, %v1155, %v1146
        %vm1212 = vcmask 1042434
        %v1213 = vsel %vm1212, %v1164, %v1211
        %vm1214 = vcmask 1043459
        %v1215 = vsel %vm1214, %v1173, %v1213
        %vm1216 = vcmask 1044484
        %v1217 = vsel %vm1216, %v1182, %v1215
        %vm1218 = vcmask 1045509
        %v1219 = vsel %vm1218, %v1191, %v1217
        %vm1220 = vcmask 1046534
        %v1221 = vsel %vm1220, %v1200, %v1219
        %vm1222 = vcmask 1047559
        %v1223 = vsel %vm1222, %v1209, %v1221
        %v1225 = vsel %vm1089, %v1223, -inf
        %vm1226 = vcmask 326656
        %v1227 = vsel %vm1226, %v1225, -inf
        %1228 = vmax.xlane.f32.xlu0 %v1227
        %v1229 = vpop.xlane.xlu0 %1228
        %v1230 = vsub.f32 %v1225, %v1229
        %v1231 = vmul.f32 %v1230, 1.442695
        %v1232 = vpow.pop %v1231
        %v1233 = vsel %vm1226, %v1232, 0.0
        %1234 = vadd.xlane.f32.xlu0 %v1233
        %v1235 = vpop.xlane.xlu0 %1234
        %v1236 = vrcp.pop %v1235
        %v1237 = vmul.f32 %v1235, %v1236
        %v1238 = vsub.f32 1.0, %v1237
        %v1239 = vmul.f32 %v1236, %v1238
        %v1240 = vadd.f32 %v1236, %v1239
        %vm1241 = vweird.f32 %v1235
        %vm1242 = vweird.f32 %v1236
        %vm1243 = vmor %vm1241, %vm1242
        %v1244 = vsel %vm1243, %v1236, %v1240
        %v1245 = vand.u32 2147483647, %v1235
        %vm1246 = vcmp.eq.f32.partialorder %v1245, 8.507059e+37
        %v1247 = vand.u32 %v1235, 2147483648
        %v1248 = vor.u32 1.1754944e-38, %v1247
        %v1249 = vsel %vm1246, %v1248, %v1244
        %v1250 = vmul.f32 %v1232, %v1249
        %1251 = vst.msk [vmem:[%s206] sm:$0xff] %vm1226, %v1250
        %s1252 = sand.u32 %s120, 1
        %s1253 = scalar_lea.sflag [#allocation3], %s1252
        %s1254 = sand.u32 %s120, 1
        %s1255 = smul.addr %s1254, 8
        %s1256 = scalar_lea.vmem [#allocation2], %s1255
        // Predicated region
        $region37: #{tpu_custom_call.1} parent=35 // pred_check
          %p1257 = pneg %p130
        $region38: #{tpu_custom_call.1} parent=35 // pred_check_branch
          %1259 = sbr.rel (%p1257) target = $region40
        $region39: #{tpu_custom_call.1} parent=35 // pred_region
          %1261 = vsyncadd %s1253, 0
          %s1262 = smul.addr %s18, 8
          %s1263 = scalar_lea.hbm %s4, %s1262
          %s1265 = sshll.u32 %s1256, 4
          %s1266 = int_to_ptr.vmem [resolvable:$true] %s1265
          %s1267 = sshll.u32 %s1263, 4
          %s1268 = int_to_ptr.hbm [resolvable:$true] %s1267
          %1270 = dma.vmem_to_hbm [thread:$0]  %s1266, 128, %s1268, %s1253
        $region40: #{tpu_custom_call.1} parent=35 // pred_fallthru
          _
      $region36: #{tpu_custom_call.1} parent=5 // pred_fallthru
        _
      %p1271 = scmp.le.s32.totalorder 2, %s13
      // Predicated region
      $region41: #{tpu_custom_call.1} parent=5 // pred_check
        %p1272 = pneg %p1271
      $region42: #{tpu_custom_call.1} parent=5 // pred_check_branch
        %1274 = sbr.rel (%p1272) target = $region44
      $region43: #{tpu_custom_call.1} parent=5 // pred_region
        %s1275 = ssub.s32 %s13, 2
        // Predicated region
        $region45: #{tpu_custom_call.1} parent=43 // pred_check
          %p1276 = pneg %p136
        $region46: #{tpu_custom_call.1} parent=43 // pred_check_branch
          %1278 = sbr.rel (%p1276) target = $region48
        $region47: #{tpu_custom_call.1} parent=43 // pred_region
          %s1279 = sand.u32 %s121, 1
          %s1280 = scalar_lea.sflag [#allocation3], %s1279
          %s1281 = sand.u32 %s121, 1
          %s1282 = smul.addr %s1281, 8
          %s1283 = scalar_lea.vmem [#allocation2], %s1282
          %1285 = dma.done %s1280, 128
        $region48: #{tpu_custom_call.1} parent=43 // pred_fallthru
          _
      $region44: #{tpu_custom_call.1} parent=5 // pred_fallthru
        _
    $region6: #{tpu_custom_call.1} parent=1 // loop_footer
      %s17 = sadd.s32 1, %s13
    $region7: #{tpu_custom_call.1} parent=1 // loop_footer_branch
      %12 = sbr.rel target = $region3
    $region8: #{tpu_custom_call.1} parent=1 // loop_exit
      _
    %1286 = vsyncpa [#allocation3], 1
    %s1287 = scalar_lea.sflag [#allocation3], 1
    %1288 = vsyncpa %s1287, 1

</llo_original>
